<compile_context>
chip_gen: v6e
topology: v6e:2x2x1
jax: 0.10.0
libtpu: 0.0.40
codegen_flags: <defaults>
</compile_context>

<pallas_src>
import jax
import jax.numpy as jnp
from jax.experimental import pallas as pl
from jax.experimental.pallas import tpu as pltpu

EPS = 1e-5


def _stats_kernel(x_ref, sum_ref, sq_ref):
    # x_ref:  (row_block//8, 8, Cf)   input tile (3-D so the row reduction is
    #                                 pure cross-vreg VPU adds, no XLU)
    # sum_ref/sq_ref: (8, Cf)         resident accumulator blocks (one per split)
    i = pl.program_id(1)

    @pl.when(i == 0)
    def _():
        sum_ref[...] = jnp.zeros_like(sum_ref)
        sq_ref[...] = jnp.zeros_like(sq_ref)

    x = x_ref[...].astype(jnp.float32)
    sum_ref[...] += jnp.sum(x, axis=0)
    sq_ref[...] += jnp.sum(x * x, axis=0)


def _norm_kernel(x_ref, scale_ref, bias_ref, o_ref):
    # Pure FMA: o = x * scale + bias (scale/bias precomputed in the wrapper).
    x = x_ref[...].astype(jnp.float32)
    o_ref[...] = (x * scale_ref[...] + bias_ref[...]).astype(o_ref.dtype)


def fast_batch_norm_1d(x, gamma, beta, *, eps=EPS, target_tile_bytes=2 * 1024 * 1024):
    """Forward of FastBatchNorm1d (training mode).

    x:     [B, N, C] (dense path) or [N, C] (sparse path), channels last.
    gamma: [C]  (bn.weight)
    beta:  [C]  (bn.bias)
    """
    if x.ndim == 3:
        C = x.shape[2]
    elif x.ndim == 2:
        C = x.shape[1]
    else:
        raise ValueError("Non supported number of dimensions {}".format(x.ndim))

    orig_shape = x.shape
    x2 = x.reshape(-1, C)
    M = x2.shape[0]

    # Lane-dense fold: pack k rows into one row of width k*C so the minor dim
    # fills the 128-wide lane axis (full-width stores instead of masked ones).
    if C < 128 and 128 % C == 0:
        k = 128 // C
    else:
        k = 1  # TODO(synk): channel padding for C not dividing/filling 128.
    Cf = k * C

    # Row-tile sizing on the folded layout (~target_tile_bytes of f32 per tile,
    # multiple of 8 sublanes).  Double-buffered in+out stays well under the
    # default scoped-VMEM limit on all of v5e/v6e/v7x.
    target_rows = max(8, (target_tile_bytes // (Cf * 4)) // 8 * 8)
    rows_needed = -(-M // k)                       # folded rows needed (ceil)
    rows_needed_r8 = -(-rows_needed // 8) * 8
    row_block = min(target_rows, rows_needed_r8)

    steps_min = -(-rows_needed // row_block)
    num_splits = 2 if steps_min >= 2 else 1        # 2 parallel stat slices (v7x: one per TC)
    steps_per_split = -(-steps_min // num_splits)
    total_steps = steps_per_split * num_splits
    Mf = total_steps * row_block                   # folded rows after padding
    M_pad = Mf * k                                 # original rows after padding

    if M_pad != M:
        # Zero padding: contributes 0 to sum and sum-of-squares, so the stats
        # stay exact when divided by the true count M.
        x2p = jnp.pad(x2, ((0, M_pad - M), (0, 0)))
    else:
        x2p = x2

    x_fold = x2p.reshape(Mf, Cf)            # lane-dense 2-D view (normalize pass)
    x_fold3 = x_fold.reshape(Mf // 8, 8, Cf)  # 3-D view (stats pass)

    # ---------------- Pass 1: per-channel sum / sum-of-squares ----------------
    sums_p, sqs_p = pl.pallas_call(
        _stats_kernel,
        out_shape=(
            jax.ShapeDtypeStruct((num_splits, 8, Cf), jnp.float32),
            jax.ShapeDtypeStruct((num_splits, 8, Cf), jnp.float32),
        ),
        grid=(num_splits, steps_per_split),
        in_specs=[
            pl.BlockSpec(
                (row_block // 8, 8, Cf),
                lambda s, i: (s * steps_per_split + i, 0, 0),
            )
        ],
        out_specs=(
            pl.BlockSpec((None, 8, Cf), lambda s, i: (s, 0, 0)),
            pl.BlockSpec((None, 8, Cf), lambda s, i: (s, 0, 0)),
        ),
        compiler_params=pltpu.CompilerParams(
            dimension_semantics=("parallel", "arbitrary")
        ),
    )(x_fold3)

    # Tiny finalize in plain JAX: fold splits, sublanes, and the k-way lane fold.
    count = jnp.float32(M)
    sum_c = sums_p.sum(axis=(0, 1)).reshape(k, C).sum(axis=0)
    sq_c = sqs_p.sum(axis=(0, 1)).reshape(k, C).sum(axis=0)
    mean = sum_c / count
    var = jnp.maximum(sq_c / count - mean * mean, 0.0)  # biased var, clamp cancellation
    inv = jax.lax.rsqrt(var + eps)
    scale_c = gamma.astype(jnp.float32) * inv
    bias_c = beta.astype(jnp.float32) - mean * scale_c
    scale_f = jnp.tile(scale_c, k).reshape(1, Cf)
    bias_f = jnp.tile(bias_c, k).reshape(1, Cf)

    # ---------------- Pass 2: fused normalize + affine (FMA) ----------------
    out_fold = pl.pallas_call(
        _norm_kernel,
        out_shape=jax.ShapeDtypeStruct((Mf, Cf), x.dtype),
        grid=(total_steps,),
        in_specs=[
            pl.BlockSpec((row_block, Cf), lambda i: (i, 0)),
            pl.BlockSpec((1, Cf), lambda i: (0, 0)),
            pl.BlockSpec((1, Cf), lambda i: (0, 0)),
        ],
        out_specs=pl.BlockSpec((row_block, Cf), lambda i: (i, 0)),
        compiler_params=pltpu.CompilerParams(dimension_semantics=("parallel",)),
    )(x_fold, scale_f, bias_f)

    out2 = out_fold.reshape(M_pad, C)[:M]
    return out2.reshape(orig_shape)


def _reference(x, gamma, beta, eps=EPS):
    # Pure-JAX reference of training-mode BatchNorm1d over channel-last input.
    x2 = x.reshape(-1, x.shape[-1]).astype(jnp.float32)
    mean = jnp.mean(x2, axis=0)
    var = jnp.mean((x2 - mean) ** 2, axis=0)  # biased
    y = (x2 - mean) * jax.lax.rsqrt(var + eps) * gamma + beta
    return y.reshape(x.shape).astype(x.dtype)


if __name__ == "__main__":
    key = jax.random.PRNGKey(0)
    k1, k2, k3, k4 = jax.random.split(key, 4)

    # Dense path: [B, N, C]
    B, N, C = 2, 64, 32
    x = jax.random.normal(k1, (B, N, C), dtype=jnp.float32) * 2.0 + 0.5
    gamma = 0.5 + jax.random.uniform(k2, (C,), dtype=jnp.float32)
    beta = jax.random.normal(k3, (C,), dtype=jnp.float32) * 0.1

    out = fast_batch_norm_1d(x, gamma, beta)
    out = jax.block_until_ready(out)
    ref = _reference(x, gamma, beta)
    assert out.shape == x.shape and out.dtype == x.dtype
    assert jnp.allclose(out, ref, atol=1e-4, rtol=1e-4), "dense path mismatch"

    # Sparse path: [N, C] with a row count that exercises the padding path.
    xs = jax.random.normal(k4, (50, C), dtype=jnp.float32) * 3.0 - 1.0
    outs = fast_batch_norm_1d(xs, gamma, beta)
    outs = jax.block_until_ready(outs)
    refs = _reference(xs, gamma, beta)
    assert outs.shape == xs.shape and outs.dtype == xs.dtype
    assert jnp.allclose(outs, refs, atol=1e-4, rtol=1e-4), "sparse path mismatch"

    print("KERNEL_OK")
</pallas_src>

<mosaic_0001>
module attributes {stable_mosaic.version = 11 : i64} {
  func.func @_stats_kernel(%arg0: i32, %arg1: i32, %arg2: memref<4x8x128xf32, #tpu.memory_space<vmem>>, %arg3: memref<1x8x128xf32, #tpu.memory_space<vmem>>, %arg4: memref<1x8x128xf32, #tpu.memory_space<vmem>>) attributes {dimension_semantics = [#tpu.dimension_semantics<parallel>, #tpu.dimension_semantics<arbitrary>], iteration_bounds = array<i64: 1, 1>, scalar_prefetch = 0 : i64, scratch_operands = 0 : i64, tpu.core_type = #tpu.core_type<tc>, window_params = [{transform_indices = @transform_0, window_bounds = array<i64: 4, 8, 128>}, {transform_indices = @transform_1, window_bounds = array<i64: 1, 8, 128>}, {transform_indices = @transform_2, window_bounds = array<i64: 1, 8, 128>}]} {
    %c0_i32 = arith.constant 0 : i32
    %0 = arith.cmpi eq, %arg1, %c0_i32 : i32
    %1 = arith.extui %0 : i1 to i32
    %c0_i32_0 = arith.constant 0 : i32
    %2 = arith.cmpi ne, %1, %c0_i32_0 : i32
    scf.if %2 {
      %cst_16 = arith.constant 0.000000e+00 : f32
      %19 = vector.broadcast %cst_16 : f32 to vector<8x128xf32>
      %c0_17 = arith.constant 0 : index
      %c0_18 = arith.constant 0 : index
      %c0_19 = arith.constant 0 : index
      %20 = vector.load %arg3[%c0_17, %c0_18, %c0_19] : memref<1x8x128xf32, #tpu.memory_space<vmem>>, vector<1x8x128xf32>
      %21 = vector.shape_cast %20 : vector<1x8x128xf32> to vector<8x128xf32>
      %22 = vector.shape_cast %19 : vector<8x128xf32> to vector<1x8x128xf32>
      tpu.vector_store %arg3[%c0_17, %c0_18, %c0_19], %22 {strides = array<i32>} : memref<1x8x128xf32, #tpu.memory_space<vmem>>, vector<1x8x128xf32>,
      %cst_20 = arith.constant 0.000000e+00 : f32
      %23 = vector.broadcast %cst_20 : f32 to vector<8x128xf32>
      %c0_21 = arith.constant 0 : index
      %c0_22 = arith.constant 0 : index
      %c0_23 = arith.constant 0 : index
      %24 = vector.load %arg4[%c0_21, %c0_22, %c0_23] : memref<1x8x128xf32, #tpu.memory_space<vmem>>, vector<1x8x128xf32>
      %25 = vector.shape_cast %24 : vector<1x8x128xf32> to vector<8x128xf32>
      %26 = vector.shape_cast %23 : vector<8x128xf32> to vector<1x8x128xf32>
      tpu.vector_store %arg4[%c0_21, %c0_22, %c0_23], %26 {strides = array<i32>} : memref<1x8x128xf32, #tpu.memory_space<vmem>>, vector<1x8x128xf32>,
    } else {
    }
    %c0 = arith.constant 0 : index
    %c0_1 = arith.constant 0 : index
    %c0_2 = arith.constant 0 : index
    %3 = vector.load %arg2[%c0, %c0_1, %c0_2] : memref<4x8x128xf32, #tpu.memory_space<vmem>>, vector<4x8x128xf32>
    %c0_3 = arith.constant 0 : index
    %c0_4 = arith.constant 0 : index
    %c0_5 = arith.constant 0 : index
    %4 = vector.load %arg3[%c0_3, %c0_4, %c0_5] : memref<1x8x128xf32, #tpu.memory_space<vmem>>, vector<1x8x128xf32>
    %5 = vector.shape_cast %4 : vector<1x8x128xf32> to vector<8x128xf32>
    %cst = arith.constant dense<0.000000e+00> : vector<8x128xf32>
    %6 = vector.multi_reduction <add>, %3, %cst [0] : vector<4x8x128xf32> to vector<8x128xf32>
    %7 = arith.addf %5, %6 : vector<8x128xf32>
    %c0_6 = arith.constant 0 : index
    %c0_7 = arith.constant 0 : index
    %c0_8 = arith.constant 0 : index
    %8 = vector.load %arg3[%c0_6, %c0_7, %c0_8] : memref<1x8x128xf32, #tpu.memory_space<vmem>>, vector<1x8x128xf32>
    %9 = vector.shape_cast %8 : vector<1x8x128xf32> to vector<8x128xf32>
    %10 = vector.shape_cast %7 : vector<8x128xf32> to vector<1x8x128xf32>
    tpu.vector_store %arg3[%c0_6, %c0_7, %c0_8], %10 {strides = array<i32>} : memref<1x8x128xf32, #tpu.memory_space<vmem>>, vector<1x8x128xf32>,
    %c0_9 = arith.constant 0 : index
    %c0_10 = arith.constant 0 : index
    %c0_11 = arith.constant 0 : index
    %11 = vector.load %arg4[%c0_9, %c0_10, %c0_11] : memref<1x8x128xf32, #tpu.memory_space<vmem>>, vector<1x8x128xf32>
    %12 = vector.shape_cast %11 : vector<1x8x128xf32> to vector<8x128xf32>
    %13 = arith.mulf %3, %3 : vector<4x8x128xf32>
    %cst_12 = arith.constant dense<0.000000e+00> : vector<8x128xf32>
    %14 = vector.multi_reduction <add>, %13, %cst_12 [0] : vector<4x8x128xf32> to vector<8x128xf32>
    %15 = arith.addf %12, %14 : vector<8x128xf32>
    %c0_13 = arith.constant 0 : index
    %c0_14 = arith.constant 0 : index
    %c0_15 = arith.constant 0 : index
    %16 = vector.load %arg4[%c0_13, %c0_14, %c0_15] : memref<1x8x128xf32, #tpu.memory_space<vmem>>, vector<1x8x128xf32>
    %17 = vector.shape_cast %16 : vector<1x8x128xf32> to vector<8x128xf32>
    %18 = vector.shape_cast %15 : vector<8x128xf32> to vector<1x8x128xf32>
    tpu.vector_store %arg4[%c0_13, %c0_14, %c0_15], %18 {strides = array<i32>} : memref<1x8x128xf32, #tpu.memory_space<vmem>>, vector<1x8x128xf32>,
    return
  }
  func.func @transform_0(%arg0: i32, %arg1: i32) -> (i32, i32, i32) {
    %c1_i32 = arith.constant 1 : i32
    %0 = arith.muli %arg0, %c1_i32 : i32
    %1 = arith.addi %0, %arg1 : i32
    %c0_i32 = arith.constant 0 : i32
    %c0_i32_0 = arith.constant 0 : i32
    %c0_i32_1 = arith.constant 0 : i32
    return %1, %c0_i32, %c0_i32_0 : i32, i32, i32
  }
  func.func @transform_1(%arg0: i32, %arg1: i32) -> (i32, i32, i32) {
    %c0_i32 = arith.constant 0 : i32
    %c0_i32_0 = arith.constant 0 : i32
    %c0_i32_1 = arith.constant 0 : i32
    return %arg0, %c0_i32, %c0_i32_0 : i32, i32, i32
  }
  func.func @transform_2(%arg0: i32, %arg1: i32) -> (i32, i32, i32) {
    %c0_i32 = arith.constant 0 : i32
    %c0_i32_0 = arith.constant 0 : i32
    %c0_i32_1 = arith.constant 0 : i32
    return %arg0, %c0_i32, %c0_i32_0 : i32, i32, i32
  }
}

</mosaic_0001>

<llo_original>
// kernel: tpu_custom_call.1
$region0: #{tpu_custom_call.1}
  #allocation0 [shape = 'u32[]', space=smem, size = 0x4, offset = 0x4, fixed_abs, tag = 'smem constant byte address 0x4 - core index']
  #allocation1 [shape = 'u32[144,128]{1,0:T(1,128)}', space=vmem, size = 0x12000, scoped, tag = 'internal scratch']
  %s0 = inlined_call_operand.hbm [shape: f32[4,8,128], index: 0, kind: input, shape index: {}]
  %s1 = inlined_call_operand.hbm [shape: f32[1,8,128], index: 1, kind: output, shape index: {0}]
  %s2 = inlined_call_operand.hbm [shape: f32[1,8,128], index: 2, kind: output, shape index: {1}]
  %3 = xla_tuple %s1, %s2
  %s4 = sld [smem:[#allocation0]]
  $region30: #{tpu_custom_call.1} parent=0
    _
  %s6 = ssub.s32 1, %s4
  %s7 = scalar_select 0, %s6, %s4
  $region1: #{tpu_custom_call.1} parent=0
    #allocation2 [shape = 'u8[16384]{0}', space=vmem, size = 0x4000, scoped, tag = 'input window, operand 0, single buffered']
    #allocation3 [shape = 's32[1]{0}', space=sflag, size = 0x4, scoped, tag = 'scoped memory for tpu_custom_call.1']
    #allocation4 [shape = 's32[1]{0}', space=sflag, size = 0x4, scoped, tag = 'scoped memory for tpu_custom_call.1']
    #allocation5 [shape = 'u8[4096]{0}', space=vmem, size = 0x1000, scoped, tag = 'output window, operand 0, single buffered']
    #allocation6 [shape = 'u8[4096]{0}', space=vmem, size = 0x1000, scoped, tag = 'output window, operand 1, single buffered']
    #allocation7 [shape = 's32[1]{0}', space=sflag, size = 0x4, scoped, tag = 'scoped memory for tpu_custom_call.1']
    %8 = vsyncpa [#allocation3], 0
    %9 = vsyncpa [#allocation4], 0
    %10 = vsyncpa [#allocation7], 0
    // Predicated region
    $region2: #{tpu_custom_call.1} parent=1 // pred_check
      _
    $region3: #{tpu_custom_call.1} parent=1 // pred_check_branch
      %12 = sbr.rel (0) target = $region5
    $region4: #{tpu_custom_call.1} parent=1 // pred_region
      %s13 = sadd.s32 0, 0
      %s14 = smul.u32 4, %s13
      %s16 = ssub.s32 512, 512
      %17 = vsyncadd [#allocation3], %s16
      %s18 = smul.addr %s14, 128
      %s19 = scalar_lea.hbm %s0, %s18
      %s20 = sshll.u32 [#allocation2], 4
      %s21 = int_to_ptr.vmem [resolvable:$true] %s20
      %26 = dma.hbm_to_vmem [thread:$0]  %s19, 512, %s21, [#allocation3], 128, 128, 8
    $region5: #{tpu_custom_call.1} parent=1 // pred_fallthru
      _
    // Predicated region
    $region6: #{tpu_custom_call.1} parent=1 // pred_check
      _
    $region7: #{tpu_custom_call.1} parent=1 // pred_check_branch
      %28 = sbr.rel (0) target = $region9
    $region8: #{tpu_custom_call.1} parent=1 // pred_region
      %29 = dma.done [#allocation3], 512
    $region9: #{tpu_custom_call.1} parent=1 // pred_fallthru
      _
    %s30 = sadd.s32 0, 0
    %s31 = smul.u32 4, %s30
    %p32 = scmp.eq.s32.totalorder 0, 0
    // Predicated region
    $region10: #{tpu_custom_call.1} parent=1 // pred_check
      %p33 = pneg %p32
    $region11: #{tpu_custom_call.1} parent=1 // pred_check_branch
      %35 = sbr.rel (%p33) target = $region13
    $region12: #{tpu_custom_call.1} parent=1 // pred_region
      %36 = vst [vmem:[#allocation5] sm:$0xff] 0.0
      %37 = vst [vmem:[#allocation6] sm:$0xff] 0.0
    $region13: #{tpu_custom_call.1} parent=1 // pred_fallthru
      _
    %v38 = vld [vmem:[#allocation2] sm:$0xff]
    %v39 = vld [vmem:[#allocation2 + $0x8] sm:$0xff]
    %v40 = vld [vmem:[#allocation2 + $0x10] sm:$0xff]
    %v41 = vld [vmem:[#allocation2 + $0x18] sm:$0xff]
    %v42 = vld [vmem:[#allocation5] sm:$0xff]
    %v43 = vadd.f32 %v38, %v39
    %v44 = vadd.f32 %v43, %v40
    %v45 = vadd.f32 %v44, %v41
    %v46 = vadd.f32 %v42, %v45
    %47 = vst [vmem:[#allocation5] sm:$0xff] %v46
    %v48 = vld [vmem:[#allocation6] sm:$0xff]
    %v49 = vmul.f32 %v38, %v38
    %v50 = vmul.f32 %v39, %v39
    %v51 = vmul.f32 %v40, %v40
    %v52 = vmul.f32 %v41, %v41
    %v53 = vadd.f32 %v49, %v50
    %v54 = vadd.f32 %v53, %v51
    %v55 = vadd.f32 %v54, %v52
    %v56 = vadd.f32 %v48, %v55
    %57 = vst [vmem:[#allocation6] sm:$0xff] %v56
    // Predicated region
    $region14: #{tpu_custom_call.1} parent=1 // pred_check
      _
    $region15: #{tpu_custom_call.1} parent=1 // pred_check_branch
      %59 = sbr.rel (0) target = $region17
    $region16: #{tpu_custom_call.1} parent=1 // pred_region
      %s61 = ssub.s32 128, 128
      %62 = vsyncadd [#allocation4], %s61
      %s64 = sshll.u32 [#allocation5], 4
      %s65 = int_to_ptr.vmem [resolvable:$true] %s64
      %67 = dma.vmem_to_hbm [thread:$0]  %s65, 128, %s1, [#allocation4]
    $region17: #{tpu_custom_call.1} parent=1 // pred_fallthru
      _
    // Predicated region
    $region18: #{tpu_custom_call.1} parent=1 // pred_check
      _
    $region19: #{tpu_custom_call.1} parent=1 // pred_check_branch
      %69 = sbr.rel (0) target = $region21
    $region20: #{tpu_custom_call.1} parent=1 // pred_region
      %s71 = ssub.s32 128, 128
      %72 = vsyncadd [#allocation7], %s71
      %s74 = sshll.u32 [#allocation6], 4
      %s75 = int_to_ptr.vmem [resolvable:$true] %s74
      %77 = dma.vmem_to_hbm [thread:$0]  %s75, 128, %s2, [#allocation7]
    $region21: #{tpu_custom_call.1} parent=1 // pred_fallthru
      _
    // Predicated region
    $region22: #{tpu_custom_call.1} parent=1 // pred_check
      _
    $region23: #{tpu_custom_call.1} parent=1 // pred_check_branch
      %79 = sbr.rel (0) target = $region25
    $region24: #{tpu_custom_call.1} parent=1 // pred_region
      %80 = dma.done [#allocation4], 128
    $region25: #{tpu_custom_call.1} parent=1 // pred_fallthru
      _
    // Predicated region
    $region26: #{tpu_custom_call.1} parent=1 // pred_check
      _
    $region27: #{tpu_custom_call.1} parent=1 // pred_check_branch
      %82 = sbr.rel (0) target = $region29
    $region28: #{tpu_custom_call.1} parent=1 // pred_region
      %83 = dma.done [#allocation7], 128
    $region29: #{tpu_custom_call.1} parent=1 // pred_fallthru
      _
    %84 = vsyncpa [#allocation3], 1
    %85 = vsyncpa [#allocation4], 1
    %86 = vsyncpa [#allocation7], 1

</llo_original>
